<compile_context>
chip_gen: v5e
topology: v5e:2x2
jax: 0.10.0
libtpu: 0.0.40
codegen_flags: <defaults>
</compile_context>

<pallas_src>
import math

import jax
import jax.numpy as jnp
from jax.experimental import pallas as pl
from jax.experimental.pallas import tpu as pltpu

PATCH = 16  # Conv2d(dim, dim, kernel_size=16, stride=16, padding=0)


# --------------------------------------------------------------------------- #
# Kernels
# --------------------------------------------------------------------------- #
def _patch_embed_resident(p_ref, w_ref, pb_ref, o_ref):
    """Weight-resident path: single matmul per row block (no K grid axis).

    p_ref : (tm, K)  bf16 im2col patch rows
    w_ref : (K, Cp)  bf16 weight (constant index_map -> DMA'd once)
    pb_ref: (tm, Cp) f32  positional encoding + conv bias (DMA'd once)
    o_ref : (tm, Cp) output rows, lane-dense
    """
    acc = jnp.dot(p_ref[...], w_ref[...], preferred_element_type=jnp.float32)
    o_ref[...] = (acc + pb_ref[...]).astype(o_ref.dtype)


def _patch_embed_tiled(p_ref, w_ref, pb_ref, o_ref, acc_ref):
    """K-tiled path: accumulate (tm, tk) x (tk, Cp) tiles over the K axis."""
    k = pl.program_id(1)

    @pl.when(k == 0)
    def _():
        acc_ref[...] = jnp.zeros_like(acc_ref)

    acc_ref[...] += jnp.dot(p_ref[...], w_ref[...],
                            preferred_element_type=jnp.float32)

    @pl.when(k == pl.num_programs(1) - 1)
    def _():
        o_ref[...] = (acc_ref[...] + pb_ref[...]).astype(o_ref.dtype)


# --------------------------------------------------------------------------- #
# Helpers
# --------------------------------------------------------------------------- #
def _sinusoidal_pe(seq_len, dim):
    """Matches PositionalEncoding: interleaved sin/cos, shape (seq_len, dim), f32."""
    position = jnp.arange(seq_len, dtype=jnp.float32)[:, None]
    div_term = jnp.exp(
        jnp.arange(0, dim, 2, dtype=jnp.float32) * (-math.log(10000.0) / dim)
    )
    pe = jnp.zeros((seq_len, dim), dtype=jnp.float32)
    pe = pe.at[:, 0::2].set(jnp.sin(position * div_term))
    pe = pe.at[:, 1::2].set(jnp.cos(position * div_term))
    return pe


def _vmem_limit_bytes():
    """Generation-aware scoped-VMEM limit."""
    cap = None
    try:
        info = pltpu.get_tpu_info()
        cap = getattr(info, "vmem_capacity_bytes", None)
    except Exception:
        cap = None
    if cap is None or cap <= 0:
        cap = 64 * 1024 * 1024
    if cap >= 128 * 1024 * 1024:          # v5e / v6e: allow large tiles
        return 96 * 1024 * 1024
    return int(cap * 3 // 5)              # v7x (64 MiB physical): leave headroom


def _row_tile_candidates(rows, S):
    """tm = m*S with m | B, so pe+bias tiles exactly and rows % tm == 0.

    tm must also be sublane-aligned (multiple of 8) or equal the full row dim.
    """
    B = rows // S
    cands = []
    for m in range(1, B + 1):
        if B % m:
            continue
        tm = m * S
        if tm % 8 == 0 or tm == rows:
            cands.append(tm)
    return cands


def _pick_tm(cands, rows, fits):
    ok = [t for t in cands if fits(t)]
    if not ok:
        return None
    multi = [t for t in ok if rows // t >= 2]   # keep both v7x TensorCores busy
    return max(multi) if multi else max(ok)


# --------------------------------------------------------------------------- #
# Forward
# --------------------------------------------------------------------------- #
def vit_extractor_forward(x, y, conv_w, conv_b, *, tile_k=2048):
    """
    x      : (B, C, H, W) feature map (NCHW, as in PyTorch)
    y      : (B, N, S_pose, 2) pose tensor (only N is used)
    conv_w : (C, C, 16, 16) Conv2d weight (OIHW)
    conv_b : (C,) Conv2d bias
    returns (output_dict, debug_info) matching the PyTorch module.
    """
    B, C, H, W = x.shape
    _, N, _, _ = y.shape
    assert C % 2 == 0, "PositionalEncoding requires an even embedding dim"
    Hp, Wp = H // PATCH, W // PATCH
    S = Hp * Wp
    K = C * PATCH * PATCH
    rows = B * S
    Cp = max(128, ((C + 127) // 128) * 128)      # lane-dense output width
    out_dtype = x.dtype
    out_b = jnp.dtype(out_dtype).itemsize

    # --- layout glue (plain JAX), bf16 to halve HBM traffic -------------------
    # TODO(synk): the im2col gather could be fused into the kernel with a manual
    # DMA gather (memory_space=pl.ANY); kept as an XLA transpose for clarity.
    xb = x[:, :, : Hp * PATCH, : Wp * PATCH].astype(jnp.bfloat16)
    patches = (
        xb.reshape(B, C, Hp, PATCH, Wp, PATCH)
        .transpose(0, 2, 4, 1, 3, 5)             # (B, Hp, Wp, C, 16, 16)
        .reshape(rows, K)
    )
    # TODO(synk): in a real model, pre-lay-out the weight as (K, Cp) bf16 once at
    # load time instead of on every forward call.
    w_mat = conv_w.astype(jnp.bfloat16).reshape(C, K).T      # (K, C), (ci,kh,kw)
    w_mat = jnp.pad(w_mat, ((0, 0), (0, Cp - C)))            # (K, Cp)

    # --- tiling (generation-aware VMEM budget) ---------------------------------
    vmem_limit = _vmem_limit_bytes()
    budget = vmem_limit - (4 << 20)

    def footprint(tm, tk, with_acc):
        f = 2 * tm * tk * 2            # patches (double-buffered, bf16)
        f += 2 * tk * Cp * 2           # weight
        f += 2 * tm * Cp * out_b       # output
        f += 2 * tm * Cp * 4           # pe + bias (f32)
        if with_acc:
            f += tm * Cp * 4           # accumulator scratch
        return f

    cands = _row_tile_candidates(rows, S)

    tm = _pick_tm(cands, rows, lambda t: footprint(t, K, False) <= budget)
    resident = tm is not None
    if resident:
        tk = K
    else:
        tk = PATCH * PATCH * math.gcd(C, max(1, tile_k // (PATCH * PATCH)))
        tm = _pick_tm(cands, rows, lambda t: footprint(t, tk, True) <= budget)
        if tm is None:
            tm = min(cands)

    # Positional encoding + conv bias as one (tm, Cp) additive block.
    # TODO(synk): Dropout(p=0.1) omitted (eval / inference mode assumed).
    pe_b = _sinusoidal_pe(S, C) + conv_b[None, :].astype(jnp.float32)
    pe_b = jnp.pad(pe_b, ((0, 0), (0, Cp - C)))
    pe_rep = jnp.tile(pe_b, (tm // S, 1))        # (tm, Cp) f32, DMA'd once

    if resident:
        grid_spec = pltpu.PrefetchScalarGridSpec(
            num_scalar_prefetch=0,
            grid=(rows // tm,),
            in_specs=[
                pl.BlockSpec((tm, K), lambda i: (i, 0)),
                pl.BlockSpec((K, Cp), lambda i: (0, 0)),    # weight resident
                pl.BlockSpec((tm, Cp), lambda i: (0, 0)),   # pe + bias
            ],
            out_specs=pl.BlockSpec((tm, Cp), lambda i: (i, 0)),
        )
        kernel = _patch_embed_resident
        dims = ("parallel",)
    else:
        grid_spec = pltpu.PrefetchScalarGridSpec(
            num_scalar_prefetch=0,
            grid=(rows // tm, K // tk),
            in_specs=[
                pl.BlockSpec((tm, tk), lambda i, k: (i, k)),
                pl.BlockSpec((tk, Cp), lambda i, k: (k, 0)),
                pl.BlockSpec((tm, Cp), lambda i, k: (0, 0)),
            ],
            out_specs=pl.BlockSpec((tm, Cp), lambda i, k: (i, 0)),
            scratch_shapes=[pltpu.VMEM((tm, Cp), jnp.float32)],
        )
        kernel = _patch_embed_tiled
        dims = ("parallel", "arbitrary")

    out_flat = pl.pallas_call(
        kernel,
        out_shape=jax.ShapeDtypeStruct((rows, Cp), out_dtype),
        grid_spec=grid_spec,
        compiler_params=pltpu.CompilerParams(
            dimension_semantics=dims,
            vmem_limit_bytes=vmem_limit,
        ),
    )(patches, w_mat, pe_rep)

    feat = out_flat[:, :C].reshape(B, S, C)
    # repeat 'B S C -> B N S C' in the wrapper (no in-kernel N-broadcast writeback).
    img_feature = jnp.broadcast_to(feat[:, None, :, :], (B, N, S, C))

    output_dict = {"img_feature": img_feature}
    debug_info = {}
    return output_dict, debug_info


# --------------------------------------------------------------------------- #
# Test
# --------------------------------------------------------------------------- #
if __name__ == "__main__":
    key = jax.random.PRNGKey(0)
    kx, ky, kw, kb = jax.random.split(key, 4)

    # dim = 8 channels, 64x64 input -> S = (64/16)^2 = 16 tokens, N = 6 queries
    B, C, H, W = 2, 8, 64, 64
    N, S_pose = 6, 5

    x = jax.random.normal(kx, (B, C, H, W), dtype=jnp.float32)
    y = jax.random.normal(ky, (B, N, S_pose, 2), dtype=jnp.float32)

    fan_in = C * PATCH * PATCH
    conv_w = jax.random.normal(kw, (C, C, PATCH, PATCH), dtype=jnp.float32) / math.sqrt(fan_in)
    conv_b = jax.random.normal(kb, (C,), dtype=jnp.float32) * 0.02

    out_dict, dbg = vit_extractor_forward(x, y, conv_w, conv_b)
    feat = jax.block_until_ready(out_dict["img_feature"])

    # ---- plain-JAX reference (high-precision conv path) ----
    ref_conv = jax.lax.conv_general_dilated(
        x, conv_w,
        window_strides=(PATCH, PATCH),
        padding="VALID",
        dimension_numbers=("NCHW", "OIHW", "NCHW"),
        precision=jax.lax.Precision.HIGHEST,
    ) + conv_b[None, :, None, None]                       # (B, C, Hp, Wp)
    S = ref_conv.shape[2] * ref_conv.shape[3]
    ref = ref_conv.reshape(B, C, S).transpose(0, 2, 1)    # 'B C H W -> B (H W) C'
    ref = ref + _sinusoidal_pe(S, C)[None]                # pos-emb (dropout = identity)
    ref = jnp.broadcast_to(ref[:, None, :, :], (B, N, S, C))

    assert feat.shape == (B, N, S, C), feat.shape
    assert jnp.allclose(feat, ref, rtol=2e-2, atol=5e-2), float(jnp.max(jnp.abs(feat - ref)))

    print("KERNEL_OK")
</pallas_src>

<mosaic_0001>
module attributes {stable_mosaic.version = 11 : i64} {
  func.func @_patch_embed_resident(%arg0: i32, %arg1: memref<16x2048xbf16, #tpu.memory_space<vmem>>, %arg2: memref<2048x128xbf16, #tpu.memory_space<vmem>>, %arg3: memref<16x128xf32, #tpu.memory_space<vmem>>, %arg4: memref<16x128xf32, #tpu.memory_space<vmem>>) attributes {dimension_semantics = [#tpu.dimension_semantics<parallel>], iteration_bounds = array<i64: 2>, scalar_prefetch = 0 : i64, scratch_operands = 0 : i64, tpu.core_type = #tpu.core_type<tc>, window_params = [{transform_indices = @transform_0, window_bounds = array<i64: 16, 2048>}, {pipeline_mode = #tpu.pipeline_mode<synchronous>, transform_indices = @transform_1, window_bounds = array<i64: 2048, 128>}, {pipeline_mode = #tpu.pipeline_mode<synchronous>, transform_indices = @transform_2, window_bounds = array<i64: 16, 128>}, {transform_indices = @transform_3, window_bounds = array<i64: 16, 128>}]} {
    %c0 = arith.constant 0 : index
    %c0_0 = arith.constant 0 : index
    %0 = vector.load %arg1[%c0, %c0_0] : memref<16x2048xbf16, #tpu.memory_space<vmem>>, vector<16x2048xbf16>
    %c0_1 = arith.constant 0 : index
    %c0_2 = arith.constant 0 : index
    %1 = vector.load %arg2[%c0_1, %c0_2] : memref<2048x128xbf16, #tpu.memory_space<vmem>>, vector<2048x128xbf16>
    %cst = arith.constant dense<0.000000e+00> : vector<16x128xf32>
    %2 = tpu.matmul %0, %1, %cst {dimension_numbers = #tpu.dot_dimension_numbers<[1], [0], [0], [1], [0, 0, 1, 1], [], []>} : vector<16x2048xbf16>, vector<2048x128xbf16>, vector<16x128xf32> -> vector<16x128xf32>
    %c0_3 = arith.constant 0 : index
    %c0_4 = arith.constant 0 : index
    %3 = vector.load %arg3[%c0_3, %c0_4] : memref<16x128xf32, #tpu.memory_space<vmem>>, vector<16x128xf32>
    %4 = arith.addf %2, %3 : vector<16x128xf32>
    %c0_5 = arith.constant 0 : index
    %c0_6 = arith.constant 0 : index
    %5 = vector.load %arg4[%c0_5, %c0_6] : memref<16x128xf32, #tpu.memory_space<vmem>>, vector<16x128xf32>
    tpu.vector_store %arg4[%c0_5, %c0_6], %4 {strides = array<i32>} : memref<16x128xf32, #tpu.memory_space<vmem>>, vector<16x128xf32>,
    return
  }
  func.func @transform_0(%arg0: i32) -> (i32, i32) {
    %c0_i32 = arith.constant 0 : i32
    %c0_i32_0 = arith.constant 0 : i32
    return %arg0, %c0_i32 : i32, i32
  }
  func.func @transform_1(%arg0: i32) -> (i32, i32) {
    %c0_i32 = arith.constant 0 : i32
    %c0_i32_0 = arith.constant 0 : i32
    %c0_i32_1 = arith.constant 0 : i32
    return %c0_i32, %c0_i32_0 : i32, i32
  }
  func.func @transform_2(%arg0: i32) -> (i32, i32) {
    %c0_i32 = arith.constant 0 : i32
    %c0_i32_0 = arith.constant 0 : i32
    %c0_i32_1 = arith.constant 0 : i32
    return %c0_i32, %c0_i32_0 : i32, i32
  }
  func.func @transform_3(%arg0: i32) -> (i32, i32) {
    %c0_i32 = arith.constant 0 : i32
    %c0_i32_0 = arith.constant 0 : i32
    return %arg0, %c0_i32 : i32, i32
  }
}

</mosaic_0001>

<llo_original>
// kernel: tpu_custom_call.1
$region0: #{tpu_custom_call.1}
  #allocation0 [shape = 'u32[]', space=smem, size = 0x4, offset = 0x4, fixed_abs, tag = 'smem constant byte address 0x4 - core index']
  #allocation1 [shape = 'u32[72,128]{1,0:T(1,128)}', space=vmem, size = 0x9000, scoped, tag = 'internal scratch']
  %s0 = inlined_call_operand.hbm [shape: bf16[32,2048], index: 0, kind: input, shape index: {}]
  %s1 = inlined_call_operand.hbm [shape: bf16[2048,128], index: 1, kind: input, shape index: {}]
  %s2 = inlined_call_operand.hbm [shape: f32[16,128], index: 2, kind: input, shape index: {}]
  %s3 = inlined_call_operand.hbm [shape: f32[32,128], index: 3, kind: output, shape index: {}]
  %s4 = sld [smem:[#allocation0]]
  $region57: #{tpu_custom_call.1} parent=0
    _
  %s6 = ssub.s32 1, %s4
  %s7 = scalar_select 0, %s6, %s4
  $region1: #{tpu_custom_call.1} parent=0
    #allocation2 [shape = 'u8[131072]{0}', space=vmem, size = 0x20000, scoped, tag = 'input window, operand 0']
    #allocation3 [shape = 's32[2]{0}', space=sflag, size = 0x8, scoped, tag = 'scoped memory for tpu_custom_call.1']
    #allocation4 [shape = 's32[2]{0}', space=sflag, size = 0x8, scoped, tag = 'scoped memory for tpu_custom_call.1']
    #allocation5 [shape = 'u8[524288]{0}', space=vmem, size = 0x80000, scoped, tag = 'input window, operand 1, single buffered']
    #allocation6 [shape = 's32[1]{0}', space=sflag, size = 0x4, scoped, tag = 'scoped memory for tpu_custom_call.1']
    #allocation7 [shape = 'u8[8192]{0}', space=vmem, size = 0x2000, scoped, tag = 'input window, operand 2, single buffered']
    #allocation8 [shape = 'u8[16384]{0}', space=vmem, size = 0x4000, scoped, tag = 'output window, operand 0']
    %8 = vsyncpa [#allocation3], 0
    %s9 = scalar_lea.sflag [#allocation3], 1
    %10 = vsyncpa %s9, 0
    %11 = vsyncpa [#allocation6], 0
    %12 = vsyncpa [#allocation4], 0
    %s13 = scalar_lea.sflag [#allocation4], 1
    %14 = vsyncpa %s13, 0
    loop: start=0, step=1, limit=4
    $region2: #{tpu_custom_call.1} parent=1 // loop_pre_header
      _
    $region3: #{tpu_custom_call.1} parent=1 // loop_header
      %s16 = sphi 0, %s20
      %p17 = scmp.ge.s32.totalorder %s16, 4
      %s26 = sphi 0, %s28
      %s29 = sphi 0, %s26
      %s30 = sphi 0, %s29
      %s46 = sphi 0, %s30
      %s50 = sphi 0, %s50
      %s52 = sphi 0, %s50
      %s53 = sphi 0, %s52
      %s67 = sphi 0, %s53
      %s71 = sphi 0, %s71
      %s73 = sphi 0, %s71
      %s74 = sphi 0, %s73
      %s88 = sphi 0, %s74
      %s94 = sphi 0, %s96
      %s97 = sphi 0, %s94
      %s98 = sphi 0, %s97
      %s114 = sphi 0, %s98
    $region4: #{tpu_custom_call.1} parent=1 // loop_header_branch
      %19 = sbr.rel (%p17) target = $region8
    $region5: #{tpu_custom_call.1} parent=1 // loop_body
      %s21 = ssub.s32 %s16, 1
      %s22 = ssub.s32 %s16, 2
      %s23 = sadd.s32 %s16, 1
      %s24 = ssub.s32 %s16, %s23
      %p25 = scmp.eq.s32.totalorder %s24, 0
      %s27 = sadd.s32 %s26, 1
      %s28 = scalar_select %p25, %s26, %s27
      %p31 = pneg %p25
      %p32 = scmp.eq.s32.totalorder %s16, 1
      %p33 = por %p31, %p32
      %p34 = scmp.ne.s32.totalorder %s26, %s29
      %p35 = scmp.eq.s32.totalorder %s16, 0
      %p36 = por %p34, %p35
      %p37 = scmp.ne.s32.totalorder %s26, %s29
      %p38 = scmp.eq.s32.totalorder %s21, 1
      %p39 = por %p37, %p38
      %p40 = scmp.ne.s32.totalorder %s29, %s30
      %p41 = scmp.eq.s32.totalorder %s21, 0
      %p42 = por %p40, %p41
      %p43 = scmp.ne.s32.totalorder %s29, %s30
      %p44 = scmp.eq.s32.totalorder %s22, 1
      %p45 = por %p43, %p44
      %p47 = scmp.ne.s32.totalorder %s30, %s46
      %p48 = scmp.eq.s32.totalorder %s22, 0
      %p49 = por %p47, %p48
      %s51 = sadd.s32 %s50, 1
      %p54 = scmp.eq.s32.totalorder %s16, 1
      %p55 = scmp.ne.s32.totalorder %s50, %s52
      %p56 = scmp.eq.s32.totalorder %s16, 0
      %p57 = por %p55, %p56
      %p58 = scmp.ne.s32.totalorder %s50, %s52
      %p59 = scmp.eq.s32.totalorder %s21, 1
      %p60 = por %p58, %p59
      %p61 = scmp.ne.s32.totalorder %s52, %s53
      %p62 = scmp.eq.s32.totalorder %s21, 0
      %p63 = por %p61, %p62
      %p64 = scmp.ne.s32.totalorder %s52, %s53
      %p65 = scmp.eq.s32.totalorder %s22, 1
      %p66 = por %p64, %p65
      %p68 = scmp.ne.s32.totalorder %s53, %s67
      %p69 = scmp.eq.s32.totalorder %s22, 0
      %p70 = por %p68, %p69
      %s72 = sadd.s32 %s71, 1
      %p75 = scmp.eq.s32.totalorder %s16, 1
      %p76 = scmp.ne.s32.totalorder %s71, %s73
      %p77 = scmp.eq.s32.totalorder %s16, 0
      %p78 = por %p76, %p77
      %p79 = scmp.ne.s32.totalorder %s71, %s73
      %p80 = scmp.eq.s32.totalorder %s21, 1
      %p81 = por %p79, %p80
      %p82 = scmp.ne.s32.totalorder %s73, %s74
      %p83 = scmp.eq.s32.totalorder %s21, 0
      %p84 = por %p82, %p83
      %p85 = scmp.ne.s32.totalorder %s73, %s74
      %p86 = scmp.eq.s32.totalorder %s22, 1
      %p87 = por %p85, %p86
      %p89 = scmp.ne.s32.totalorder %s74, %s88
      %p90 = scmp.eq.s32.totalorder %s22, 0
      %p91 = por %p89, %p90
      %s92 = ssub.s32 %s16, %s23
      %p93 = scmp.eq.s32.totalorder %s92, 0
      %s95 = sadd.s32 %s94, 1
      %s96 = scalar_select %p93, %s94, %s95
      %p99 = pneg %p93
      %p100 = scmp.eq.s32.totalorder %s16, 1
      %p101 = por %p99, %p100
      %p102 = scmp.ne.s32.totalorder %s94, %s97
      %p103 = scmp.eq.s32.totalorder %s16, 0
      %p104 = por %p102, %p103
      %p105 = scmp.ne.s32.totalorder %s94, %s97
      %p106 = scmp.eq.s32.totalorder %s21, 1
      %p107 = por %p105, %p106
      %p108 = scmp.ne.s32.totalorder %s97, %s98
      %p109 = scmp.eq.s32.totalorder %s21, 0
      %p110 = por %p108, %p109
      %p111 = scmp.ne.s32.totalorder %s97, %s98
      %p112 = scmp.eq.s32.totalorder %s22, 1
      %p113 = por %p111, %p112
      %p115 = scmp.ne.s32.totalorder %s98, %s114
      %p116 = scmp.eq.s32.totalorder %s22, 0
      %p117 = por %p115, %p116
      %p118 = scmp.le.s32.totalorder 1, %s16
      %p119 = scmp.lt.s32.totalorder %s16, 3
      %p120 = pnand %p118, %p119
      %p121 = pneg %p120
      // Predicated region
      $region9: #{tpu_custom_call.1} parent=5 // pred_check
        _
      $region10: #{tpu_custom_call.1} parent=5 // pred_check_branch
        %123 = sbr.rel (%p120) target = $region12
      $region11: #{tpu_custom_call.1} parent=5 // pred_region
        %s124 = ssub.s32 %s16, 1
        // Predicated region
        $region13: #{tpu_custom_call.1} parent=11 // pred_check
          %p125 = pneg %p63
        $region14: #{tpu_custom_call.1} parent=11 // pred_check_branch
          %127 = sbr.rel (%p125) target = $region16
        $region15: #{tpu_custom_call.1} parent=11 // pred_region
          %129 = vsyncadd [#allocation6], 0
          %s130 = sshll.u32 %s1, 4
          %s131 = int_to_ptr.hbm [resolvable:$true] %s130
          %s132 = sshll.u32 [#allocation5], 4
          %s133 = int_to_ptr.vmem [resolvable:$true] %s132
          %138 = dma.hbm_to_vmem [thread:$0]  %s131, 16384, %s133, [#allocation6], 64, 64, 4
        $region16: #{tpu_custom_call.1} parent=11 // pred_fallthru
          _
        // Predicated region
        $region17: #{tpu_custom_call.1} parent=11 // pred_check
          %p139 = pneg %p84
        $region18: #{tpu_custom_call.1} parent=11 // pred_check_branch
          %141 = sbr.rel (%p139) target = $region20
        $region19: #{tpu_custom_call.1} parent=11 // pred_region
          %143 = vsyncadd [#allocation6], 0
          %s144 = sshll.u32 %s2, 4
          %s145 = int_to_ptr.hbm [resolvable:$true] %s144
          %s146 = sshll.u32 [#allocation7], 4
          %s147 = int_to_ptr.vmem [resolvable:$true] %s146
          %152 = dma.hbm_to_vmem [thread:$0]  %s145, 256, %s147, [#allocation6], 128, 128, 8
        $region20: #{tpu_custom_call.1} parent=11 // pred_fallthru
          _
      $region12: #{tpu_custom_call.1} parent=5 // pred_fallthru
        _
      %p153 = scmp.lt.s32.totalorder %s16, 2
      // Predicated region
      $region21: #{tpu_custom_call.1} parent=5 // pred_check
        %p154 = pneg %p153
      $region22: #{tpu_custom_call.1} parent=5 // pred_check_branch
        %156 = sbr.rel (%p154) target = $region24
      $region23: #{tpu_custom_call.1} parent=5 // pred_region
        // Predicated region
        $region25: #{tpu_custom_call.1} parent=23 // pred_check
          %p157 = pneg %p36
        $region26: #{tpu_custom_call.1} parent=23 // pred_check_branch
          %159 = sbr.rel (%p157) target = $region28
        $region27: #{tpu_custom_call.1} parent=23 // pred_region
          %s160 = sand.u32 %s26, 1
          %s161 = scalar_lea.sflag [#allocation3], %s160
          %s162 = sand.u32 %s26, 1
          %s163 = smul.addr %s162, 128
          %s164 = scalar_lea.vmem [#allocation2], %s163
          %s165 = smul.u32 2, %s16
          %167 = vsyncadd %s161, 0
          %s168 = smul.addr %s165, 16
          %s169 = smul.addr %s168, 4
          %s170 = scalar_lea.hbm %s0, %s169
          %s171 = sshll.u32 %s170, 4
          %s172 = int_to_ptr.hbm [resolvable:$true] %s171
          %s173 = sshll.u32 %s164, 4
          %s174 = int_to_ptr.vmem [resolvable:$true] %s173
          %179 = dma.hbm_to_vmem [thread:$0]  %s172, 2048, %s174, %s161, 1024, 1024, 64
        $region28: #{tpu_custom_call.1} parent=23 // pred_fallthru
          _
      $region24: #{tpu_custom_call.1} parent=5 // pred_fallthru
        _
      %p180 = scmp.le.s32.totalorder 1, %s16
      %p181 = scmp.lt.s32.totalorder %s16, 3
      %p182 = pnand %p180, %p181
      %p183 = pneg %p182
      // Predicated region
      $region29: #{tpu_custom_call.1} parent=5 // pred_check
        _
      $region30: #{tpu_custom_call.1} parent=5 // pred_check_branch
        %185 = sbr.rel (%p182) target = $region32
      $region31: #{tpu_custom_call.1} parent=5 // pred_region
        %s186 = ssub.s32 %s16, 1
        %s187 = sand.u32 %s29, 1
        %s188 = scalar_lea.sflag [#allocation3], %s187
        %s189 = sand.u32 %s29, 1
        %s190 = smul.addr %s189, 128
        %s191 = scalar_lea.vmem [#allocation2], %s190
        // Predicated region
        $region33: #{tpu_custom_call.1} parent=31 // pred_check
          %p192 = pneg %p42
        $region34: #{tpu_custom_call.1} parent=31 // pred_check_branch
          %194 = sbr.rel (%p192) target = $region36
        $region35: #{tpu_custom_call.1} parent=31 // pred_region
          %196 = dma.done %s188, 2048
        $region36: #{tpu_custom_call.1} parent=31 // pred_fallthru
          _
        // Predicated region
        $region37: #{tpu_custom_call.1} parent=31 // pred_check
          %p197 = pneg %p63
        $region38: #{tpu_custom_call.1} parent=31 // pred_check_branch
          %199 = sbr.rel (%p197) target = $region40
        $region39: #{tpu_custom_call.1} parent=31 // pred_region
          %201 = dma.done [#allocation6], 16384
        $region40: #{tpu_custom_call.1} parent=31 // pred_fallthru
          _
        // Predicated region
        $region41: #{tpu_custom_call.1} parent=31 // pred_check
          %p202 = pneg %p84
        $region42: #{tpu_custom_call.1} parent=31 // pred_check_branch
          %204 = sbr.rel (%p202) target = $region44
        $region43: #{tpu_custom_call.1} parent=31 // pred_region
          %206 = dma.done [#allocation6], 256
        $region44: #{tpu_custom_call.1} parent=31 // pred_fallthru
          _
        %s207 = sand.u32 %s29, 1
        %s208 = scalar_lea.sflag [#allocation3], %s207
        %s209 = sand.u32 %s29, 1
        %s210 = smul.addr %s209, 128
        %s211 = scalar_lea.vmem [#allocation2], %s210
        %p212 = pneg %p42
        %p213 = pneg %p39
        %p214 = pneg %p63
        %p215 = pneg %p60
        %p216 = pneg %p84
        %p217 = pneg %p81
        %p218 = pneg %p110
        %p219 = pneg %p107
        %s220 = sand.u32 %s97, 1
        %s221 = scalar_lea.sflag [#allocation4], %s220
        %s222 = sand.u32 %s97, 1
        %s223 = smul.addr %s222, 16
        %s224 = scalar_lea.vmem [#allocation8], %s223
        %s225 = smul.u32 2, %s21
        %s226 = smul.u32 2, %s21
        %v227 = vld [vmem:[%s191] sm:$0xff]
        %v228 = vld [vmem:[%s191 + $0x8] sm:$0xff]
        %v229 = vld [vmem:[%s191 + $0x10] sm:$0xff]
        %v230 = vld [vmem:[%s191 + $0x18] sm:$0xff]
        %v231 = vld [vmem:[%s191 + $0x20] sm:$0xff]
        %v232 = vld [vmem:[%s191 + $0x28] sm:$0xff]
        %v233 = vld [vmem:[%s191 + $0x30] sm:$0xff]
        %v234 = vld [vmem:[%s191 + $0x38] sm:$0xff]
        %v235 = vld [vmem:[%s191 + $0x40] sm:$0xff]
        %v236 = vld [vmem:[%s191 + $0x48] sm:$0xff]
        %v237 = vld [vmem:[%s191 + $0x50] sm:$0xff]
        %v238 = vld [vmem:[%s191 + $0x58] sm:$0xff]
        %v239 = vld [vmem:[%s191 + $0x60] sm:$0xff]
        %v240 = vld [vmem:[%s191 + $0x68] sm:$0xff]
        %v241 = vld [vmem:[%s191 + $0x70] sm:$0xff]
        %v242 = vld [vmem:[%s191 + $0x78] sm:$0xff]
        %v243 = vld [vmem:[#allocation5] sm:$0xf]
        %v244 = vld [vmem:[#allocation5 + $0x4] sm:$0xf]
        %v245 = vld [vmem:[#allocation5 + $0x8] sm:$0xf]
        %v246 = vld [vmem:[#allocation5 + $0xc] sm:$0xf]
        %v247 = vld [vmem:[#allocation5 + $0x10] sm:$0xf]
        %v248 = vld [vmem:[#allocation5 + $0x14] sm:$0xf]
        %v249 = vld [vmem:[#allocation5 + $0x18] sm:$0xf]
        %v250 = vld [vmem:[#allocation5 + $0x1c] sm:$0xf]
        %v251 = vld [vmem:[#allocation5 + $0x20] sm:$0xf]
        %v252 = vld [vmem:[#allocation5 + $0x24] sm:$0xf]
        %v253 = vld [vmem:[#allocation5 + $0x28] sm:$0xf]
        %v254 = vld [vmem:[#allocation5 + $0x2c] sm:$0xf]
        %v255 = vld [vmem:[#allocation5 + $0x30] sm:$0xf]
        %v256 = vld [vmem:[#allocation5 + $0x34] sm:$0xf]
        %v257 = vld [vmem:[#allocation5 + $0x38] sm:$0xf]
        %v258 = vld [vmem:[#allocation5 + $0x3c] sm:$0xf]
        %v259 = vld [vmem:[#allocation5 + $0x40] sm:$0xf]
        %v260 = vld [vmem:[#allocation5 + $0x44] sm:$0xf]
        %v261 = vld [vmem:[#allocation5 + $0x48] sm:$0xf]
        %v262 = vld [vmem:[#allocation5 + $0x4c] sm:$0xf]
        %v263 = vld [vmem:[#allocation5 + $0x50] sm:$0xf]
        %v264 = vld [vmem:[#allocation5 + $0x54] sm:$0xf]
        %v265 = vld [vmem:[#allocation5 + $0x58] sm:$0xf]
        %v266 = vld [vmem:[#allocation5 + $0x5c] sm:$0xf]
        %v267 = vld [vmem:[#allocation5 + $0x60] sm:$0xf]
        %v268 = vld [vmem:[#allocation5 + $0x64] sm:$0xf]
        %v269 = vld [vmem:[#allocation5 + $0x68] sm:$0xf]
        %v270 = vld [vmem:[#allocation5 + $0x6c] sm:$0xf]
        %v271 = vld [vmem:[#allocation5 + $0x70] sm:$0xf]
        %v272 = vld [vmem:[#allocation5 + $0x74] sm:$0xf]
        %v273 = vld [vmem:[#allocation5 + $0x78] sm:$0xf]
        %v274 = vld [vmem:[#allocation5 + $0x7c] sm:$0xf]
        %v275 = vld [vmem:[#allocation5 + $0x80] sm:$0xf]
        %v276 = vld [vmem:[#allocation5 + $0x84] sm:$0xf]
        %v277 = vld [vmem:[#allocation5 + $0x88] sm:$0xf]
        %v278 = vld [vmem:[#allocation5 + $0x8c] sm:$0xf]
        %v279 = vld [vmem:[#allocation5 + $0x90] sm:$0xf]
        %v280 = vld [vmem:[#allocation5 + $0x94] sm:$0xf]
        %v281 = vld [vmem:[#allocation5 + $0x98] sm:$0xf]
        %v282 = vld [vmem:[#allocation5 + $0x9c] sm:$0xf]
        %v283 = vld [vmem:[#allocation5 + $0xa0] sm:$0xf]
        %v284 = vld [vmem:[#allocation5 + $0xa4] sm:$0xf]
        %v285 = vld [vmem:[#allocation5 + $0xa8] sm:$0xf]
        %v286 = vld [vmem:[#allocation5 + $0xac] sm:$0xf]
        %v287 = vld [vmem:[#allocation5 + $0xb0] sm:$0xf]
        %v288 = vld [vmem:[#allocation5 + $0xb4] sm:$0xf]
        %v289 = vld [vmem:[#allocation5 + $0xb8] sm:$0xf]
        %v290 = vld [vmem:[#allocation5 + $0xbc] sm:$0xf]
        %v291 = vld [vmem:[#allocation5 + $0xc0] sm:$0xf]
        %v292 = vld [vmem:[#allocation5 + $0xc4] sm:$0xf]
        %v293 = vld [vmem:[#allocation5 + $0xc8] sm:$0xf]
        %v294 = vld [vmem:[#allocation5 + $0xcc] sm:$0xf]
        %v295 = vld [vmem:[#allocation5 + $0xd0] sm:$0xf]
        %v296 = vld [vmem:[#allocation5 + $0xd4] sm:$0xf]
        %v297 = vld [vmem:[#allocation5 + $0xd8] sm:$0xf]
        %v298 = vld [vmem:[#allocation5 + $0xdc] sm:$0xf]
        %v299 = vld [vmem:[#allocation5 + $0xe0] sm:$0xf]
        %v300 = vld [vmem:[#allocation5 + $0xe4] sm:$0xf]
        %v301 = vld [vmem:[#allocation5 + $0xe8] sm:$0xf]
        %v302 = vld [vmem:[#allocation5 + $0xec] sm:$0xf]
        %v303 = vld [vmem:[#allocation5 + $0xf0] sm:$0xf]
        %v304 = vld [vmem:[#allocation5 + $0xf4] sm:$0xf]
        %v305 = vld [vmem:[#allocation5 + $0xf8] sm:$0xf]
        %v306 = vld [vmem:[#allocation5 + $0xfc] sm:$0xf]
        %v307 = vld [vmem:[#allocation5 + $0x100] sm:$0xf]
        %v308 = vld [vmem:[#allocation5 + $0x104] sm:$0xf]
        %v309 = vld [vmem:[#allocation5 + $0x108] sm:$0xf]
        %v310 = vld [vmem:[#allocation5 + $0x10c] sm:$0xf]
        %v311 = vld [vmem:[#allocation5 + $0x110] sm:$0xf]
        %v312 = vld [vmem:[#allocation5 + $0x114] sm:$0xf]
        %v313 = vld [vmem:[#allocation5 + $0x118] sm:$0xf]
        %v314 = vld [vmem:[#allocation5 + $0x11c] sm:$0xf]
        %v315 = vld [vmem:[#allocation5 + $0x120] sm:$0xf]
        %v316 = vld [vmem:[#allocation5 + $0x124] sm:$0xf]
        %v317 = vld [vmem:[#allocation5 + $0x128] sm:$0xf]
        %v318 = vld [vmem:[#allocation5 + $0x12c] sm:$0xf]
        %v319 = vld [vmem:[#allocation5 + $0x130] sm:$0xf]
        %v320 = vld [vmem:[#allocation5 + $0x134] sm:$0xf]
        %v321 = vld [vmem:[#allocation5 + $0x138] sm:$0xf]
        %v322 = vld [vmem:[#allocation5 + $0x13c] sm:$0xf]
        %v323 = vld [vmem:[#allocation5 + $0x140] sm:$0xf]
        %v324 = vld [vmem:[#allocation5 + $0x144] sm:$0xf]
        %v325 = vld [vmem:[#allocation5 + $0x148] sm:$0xf]
        %v326 = vld [vmem:[#allocation5 + $0x14c] sm:$0xf]
        %v327 = vld [vmem:[#allocation5 + $0x150] sm:$0xf]
        %v328 = vld [vmem:[#allocation5 + $0x154] sm:$0xf]
        %v329 = vld [vmem:[#allocation5 + $0x158] sm:$0xf]
        %v330 = vld [vmem:[#allocation5 + $0x15c] sm:$0xf]
        %v331 = vld [vmem:[#allocation5 + $0x160] sm:$0xf]
        %v332 = vld [vmem:[#allocation5 + $0x164] sm:$0xf]
        %v333 = vld [vmem:[#allocation5 + $0x168] sm:$0xf]
        %v334 = vld [vmem:[#allocation5 + $0x16c] sm:$0xf]
        %v335 = vld [vmem:[#allocation5 + $0x170] sm:$0xf]
        %v336 = vld [vmem:[#allocation5 + $0x174] sm:$0xf]
        %v337 = vld [vmem:[#allocation5 + $0x178] sm:$0xf]
        %v338 = vld [vmem:[#allocation5 + $0x17c] sm:$0xf]
        %v339 = vld [vmem:[#allocation5 + $0x180] sm:$0xf]
        %v340 = vld [vmem:[#allocation5 + $0x184] sm:$0xf]
        %v341 = vld [vmem:[#allocation5 + $0x188] sm:$0xf]
        %v342 = vld [vmem:[#allocation5 + $0x18c] sm:$0xf]
        %v343 = vld [vmem:[#allocation5 + $0x190] sm:$0xf]
        %v344 = vld [vmem:[#allocation5 + $0x194] sm:$0xf]
        %v345 = vld [vmem:[#allocation5 + $0x198] sm:$0xf]
        %v346 = vld [vmem:[#allocation5 + $0x19c] sm:$0xf]
        %v347 = vld [vmem:[#allocation5 + $0x1a0] sm:$0xf]
        %v348 = vld [vmem:[#allocation5 + $0x1a4] sm:$0xf]
        %v349 = vld [vmem:[#allocation5 + $0x1a8] sm:$0xf]
        %v350 = vld [vmem:[#allocation5 + $0x1ac] sm:$0xf]
        %v351 = vld [vmem:[#allocation5 + $0x1b0] sm:$0xf]
        %v352 = vld [vmem:[#allocation5 + $0x1b4] sm:$0xf]
        %v353 = vld [vmem:[#allocation5 + $0x1b8] sm:$0xf]
        %v354 = vld [vmem:[#allocation5 + $0x1bc] sm:$0xf]
        %v355 = vld [vmem:[#allocation5 + $0x1c0] sm:$0xf]
        %v356 = vld [vmem:[#allocation5 + $0x1c4] sm:$0xf]
        %v357 = vld [vmem:[#allocation5 + $0x1c8] sm:$0xf]
        %v358 = vld [vmem:[#allocation5 + $0x1cc] sm:$0xf]
        %v359 = vld [vmem:[#allocation5 + $0x1d0] sm:$0xf]
        %v360 = vld [vmem:[#allocation5 + $0x1d4] sm:$0xf]
        %v361 = vld [vmem:[#allocation5 + $0x1d8] sm:$0xf]
        %v362 = vld [vmem:[#allocation5 + $0x1dc] sm:$0xf]
        %v363 = vld [vmem:[#allocation5 + $0x1e0] sm:$0xf]
        %v364 = vld [vmem:[#allocation5 + $0x1e4] sm:$0xf]
        %v365 = vld [vmem:[#allocation5 + $0x1e8] sm:$0xf]
        %v366 = vld [vmem:[#allocation5 + $0x1ec] sm:$0xf]
        %v367 = vld [vmem:[#allocation5 + $0x1f0] sm:$0xf]
        %v368 = vld [vmem:[#allocation5 + $0x1f4] sm:$0xf]
        %v369 = vld [vmem:[#allocation5 + $0x1f8] sm:$0xf]
        %v370 = vld [vmem:[#allocation5 + $0x1fc] sm:$0xf]
        %v371 = vld [vmem:[#allocation5 + $0x200] sm:$0xf]
        %v372 = vld [vmem:[#allocation5 + $0x204] sm:$0xf]
        %v373 = vld [vmem:[#allocation5 + $0x208] sm:$0xf]
        %v374 = vld [vmem:[#allocation5 + $0x20c] sm:$0xf]
        %v375 = vld [vmem:[#allocation5 + $0x210] sm:$0xf]
        %v376 = vld [vmem:[#allocation5 + $0x214] sm:$0xf]
        %v377 = vld [vmem:[#allocation5 + $0x218] sm:$0xf]
        %v378 = vld [vmem:[#allocation5 + $0x21c] sm:$0xf]
        %v379 = vld [vmem:[#allocation5 + $0x220] sm:$0xf]
        %v380 = vld [vmem:[#allocation5 + $0x224] sm:$0xf]
        %v381 = vld [vmem:[#allocation5 + $0x228] sm:$0xf]
        %v382 = vld [vmem:[#allocation5 + $0x22c] sm:$0xf]
        %v383 = vld [vmem:[#allocation5 + $0x230] sm:$0xf]
        %v384 = vld [vmem:[#allocation5 + $0x234] sm:$0xf]
        %v385 = vld [vmem:[#allocation5 + $0x238] sm:$0xf]
        %v386 = vld [vmem:[#allocation5 + $0x23c] sm:$0xf]
        %v387 = vld [vmem:[#allocation5 + $0x240] sm:$0xf]
        %v388 = vld [vmem:[#allocation5 + $0x244] sm:$0xf]
        %v389 = vld [vmem:[#allocation5 + $0x248] sm:$0xf]
        %v390 = vld [vmem:[#allocation5 + $0x24c] sm:$0xf]
        %v391 = vld [vmem:[#allocation5 + $0x250] sm:$0xf]
        %v392 = vld [vmem:[#allocation5 + $0x254] sm:$0xf]
        %v393 = vld [vmem:[#allocation5 + $0x258] sm:$0xf]
        %v394 = vld [vmem:[#allocation5 + $0x25c] sm:$0xf]
        %v395 = vld [vmem:[#allocation5 + $0x260] sm:$0xf]
        %v396 = vld [vmem:[#allocation5 + $0x264] sm:$0xf]
        %v397 = vld [vmem:[#allocation5 + $0x268] sm:$0xf]
        %v398 = vld [vmem:[#allocation5 + $0x26c] sm:$0xf]
        %v399 = vld [vmem:[#allocation5 + $0x270] sm:$0xf]
        %v400 = vld [vmem:[#allocation5 + $0x274] sm:$0xf]
        %v401 = vld [vmem:[#allocation5 + $0x278] sm:$0xf]
        %v402 = vld [vmem:[#allocation5 + $0x27c] sm:$0xf]
        %v403 = vld [vmem:[#allocation5 + $0x280] sm:$0xf]
        %v404 = vld [vmem:[#allocation5 + $0x284] sm:$0xf]
        %v405 = vld [vmem:[#allocation5 + $0x288] sm:$0xf]
        %v406 = vld [vmem:[#allocation5 + $0x28c] sm:$0xf]
        %v407 = vld [vmem:[#allocation5 + $0x290] sm:$0xf]
        %v408 = vld [vmem:[#allocation5 + $0x294] sm:$0xf]
        %v409 = vld [vmem:[#allocation5 + $0x298] sm:$0xf]
        %v410 = vld [vmem:[#allocation5 + $0x29c] sm:$0xf]
        %v411 = vld [vmem:[#allocation5 + $0x2a0] sm:$0xf]
        %v412 = vld [vmem:[#allocation5 + $0x2a4] sm:$0xf]
        %v413 = vld [vmem:[#allocation5 + $0x2a8] sm:$0xf]
        %v414 = vld [vmem:[#allocation5 + $0x2ac] sm:$0xf]
        %v415 = vld [vmem:[#allocation5 + $0x2b0] sm:$0xf]
        %v416 = vld [vmem:[#allocation5 + $0x2b4] sm:$0xf]
        %v417 = vld [vmem:[#allocation5 + $0x2b8] sm:$0xf]
        %v418 = vld [vmem:[#allocation5 + $0x2bc] sm:$0xf]
        %v419 = vld [vmem:[#allocation5 + $0x2c0] sm:$0xf]
        %v420 = vld [vmem:[#allocation5 + $0x2c4] sm:$0xf]
        %v421 = vld [vmem:[#allocation5 + $0x2c8] sm:$0xf]
        %v422 = vld [vmem:[#allocation5 + $0x2cc] sm:$0xf]
        %v423 = vld [vmem:[#allocation5 + $0x2d0] sm:$0xf]
        %v424 = vld [vmem:[#allocation5 + $0x2d4] sm:$0xf]
        %v425 = vld [vmem:[#allocation5 + $0x2d8] sm:$0xf]
        %v426 = vld [vmem:[#allocation5 + $0x2dc] sm:$0xf]
        %v427 = vld [vmem:[#allocation5 + $0x2e0] sm:$0xf]
        %v428 = vld [vmem:[#allocation5 + $0x2e4] sm:$0xf]
        %v429 = vld [vmem:[#allocation5 + $0x2e8] sm:$0xf]
        %v430 = vld [vmem:[#allocation5 + $0x2ec] sm:$0xf]
        %v431 = vld [vmem:[#allocation5 + $0x2f0] sm:$0xf]
        %v432 = vld [vmem:[#allocation5 + $0x2f4] sm:$0xf]
        %v433 = vld [vmem:[#allocation5 + $0x2f8] sm:$0xf]
        %v434 = vld [vmem:[#allocation5 + $0x2fc] sm:$0xf]
        %v435 = vld [vmem:[#allocation5 + $0x300] sm:$0xf]
        %v436 = vld [vmem:[#allocation5 + $0x304] sm:$0xf]
        %v437 = vld [vmem:[#allocation5 + $0x308] sm:$0xf]
        %v438 = vld [vmem:[#allocation5 + $0x30c] sm:$0xf]
        %v439 = vld [vmem:[#allocation5 + $0x310] sm:$0xf]
        %v440 = vld [vmem:[#allocation5 + $0x314] sm:$0xf]
        %v441 = vld [vmem:[#allocation5 + $0x318] sm:$0xf]
        %v442 = vld [vmem:[#allocation5 + $0x31c] sm:$0xf]
        %v443 = vld [vmem:[#allocation5 + $0x320] sm:$0xf]
        %v444 = vld [vmem:[#allocation5 + $0x324] sm:$0xf]
        %v445 = vld [vmem:[#allocation5 + $0x328] sm:$0xf]
        %v446 = vld [vmem:[#allocation5 + $0x32c] sm:$0xf]
        %v447 = vld [vmem:[#allocation5 + $0x330] sm:$0xf]
        %v448 = vld [vmem:[#allocation5 + $0x334] sm:$0xf]
        %v449 = vld [vmem:[#allocation5 + $0x338] sm:$0xf]
        %v450 = vld [vmem:[#allocation5 + $0x33c] sm:$0xf]
        %v451 = vld [vmem:[#allocation5 + $0x340] sm:$0xf]
        %v452 = vld [vmem:[#allocation5 + $0x344] sm:$0xf]
        %v453 = vld [vmem:[#allocation5 + $0x348] sm:$0xf]
        %v454 = vld [vmem:[#allocation5 + $0x34c] sm:$0xf]
        %v455 = vld [vmem:[#allocation5 + $0x350] sm:$0xf]
        %v456 = vld [vmem:[#allocation5 + $0x354] sm:$0xf]
        %v457 = vld [vmem:[#allocation5 + $0x358] sm:$0xf]
        %v458 = vld [vmem:[#allocation5 + $0x35c] sm:$0xf]
        %v459 = vld [vmem:[#allocation5 + $0x360] sm:$0xf]
        %v460 = vld [vmem:[#allocation5 + $0x364] sm:$0xf]
        %v461 = vld [vmem:[#allocation5 + $0x368] sm:$0xf]
        %v462 = vld [vmem:[#allocation5 + $0x36c] sm:$0xf]
        %v463 = vld [vmem:[#allocation5 + $0x370] sm:$0xf]
        %v464 = vld [vmem:[#allocation5 + $0x374] sm:$0xf]
        %v465 = vld [vmem:[#allocation5 + $0x378] sm:$0xf]
        %v466 = vld [vmem:[#allocation5 + $0x37c] sm:$0xf]
        %v467 = vld [vmem:[#allocation5 + $0x380] sm:$0xf]
        %v468 = vld [vmem:[#allocation5 + $0x384] sm:$0xf]
        %v469 = vld [vmem:[#allocation5 + $0x388] sm:$0xf]
        %v470 = vld [vmem:[#allocation5 + $0x38c] sm:$0xf]
        %v471 = vld [vmem:[#allocation5 + $0x390] sm:$0xf]
        %v472 = vld [vmem:[#allocation5 + $0x394] sm:$0xf]
        %v473 = vld [vmem:[#allocation5 + $0x398] sm:$0xf]
        %v474 = vld [vmem:[#allocation5 + $0x39c] sm:$0xf]
        %v475 = vld [vmem:[#allocation5 + $0x3a0] sm:$0xf]
        %v476 = vld [vmem:[#allocation5 + $0x3a4] sm:$0xf]
        %v477 = vld [vmem:[#allocation5 + $0x3a8] sm:$0xf]
        %v478 = vld [vmem:[#allocation5 + $0x3ac] sm:$0xf]
        %v479 = vld [vmem:[#allocation5 + $0x3b0] sm:$0xf]
        %v480 = vld [vmem:[#allocation5 + $0x3b4] sm:$0xf]
        %v481 = vld [vmem:[#allocation5 + $0x3b8] sm:$0xf]
        %v482 = vld [vmem:[#allocation5 + $0x3bc] sm:$0xf]
        %v483 = vld [vmem:[#allocation5 + $0x3c0] sm:$0xf]
        %v484 = vld [vmem:[#allocation5 + $0x3c4] sm:$0xf]
        %v485 = vld [vmem:[#allocation5 + $0x3c8] sm:$0xf]
        %v486 = vld [vmem:[#allocation5 + $0x3cc] sm:$0xf]
        %v487 = vld [vmem:[#allocation5 + $0x3d0] sm:$0xf]
        %v488 = vld [vmem:[#allocation5 + $0x3d4] sm:$0xf]
        %v489 = vld [vmem:[#allocation5 + $0x3d8] sm:$0xf]
        %v490 = vld [vmem:[#allocation5 + $0x3dc] sm:$0xf]
        %v491 = vld [vmem:[#allocation5 + $0x3e0] sm:$0xf]
        %v492 = vld [vmem:[#allocation5 + $0x3e4] sm:$0xf]
        %v493 = vld [vmem:[#allocation5 + $0x3e8] sm:$0xf]
        %v494 = vld [vmem:[#allocation5 + $0x3ec] sm:$0xf]
        %v495 = vld [vmem:[#allocation5 + $0x3f0] sm:$0xf]
        %v496 = vld [vmem:[#allocation5 + $0x3f4] sm:$0xf]
        %v497 = vld [vmem:[#allocation5 + $0x3f8] sm:$0xf]
        %v498 = vld [vmem:[#allocation5 + $0x3fc] sm:$0xf]
        %v499 = vld [vmem:[#allocation7] sm:$0xff]
        %v500 = vld [vmem:[#allocation7 + $0x8] sm:$0xff]
        %v517 = vunpack.c.l.b16 %v227
        %v518 = vunpack.c.h.b16 %v227
        %v519 = vunpack.c.l.b16 %v228
        %v520 = vunpack.c.h.b16 %v228
        %v521 = vunpack.c.l.b16 %v229
        %v522 = vunpack.c.h.b16 %v229
        %v523 = vunpack.c.l.b16 %v230
        %v524 = vunpack.c.h.b16 %v230
        %v525 = vunpack.c.l.b16 %v231
        %v526 = vunpack.c.h.b16 %v231
        %v527 = vunpack.c.l.b16 %v232
        %v528 = vunpack.c.h.b16 %v232
        %v529 = vunpack.c.l.b16 %v233
        %v530 = vunpack.c.h.b16 %v233
        %v531 = vunpack.c.l.b16 %v234
        %v532 = vunpack.c.h.b16 %v234
        %v533 = vunpack.c.l.b16 %v235
        %v534 = vunpack.c.h.b16 %v235
        %v535 = vunpack.c.l.b16 %v236
        %v536 = vunpack.c.h.b16 %v236
        %v537 = vunpack.c.l.b16 %v237
        %v538 = vunpack.c.h.b16 %v237
        %v539 = vunpack.c.l.b16 %v238
        %v540 = vunpack.c.h.b16 %v238
        %v541 = vunpack.c.l.b16 %v239
        %v542 = vunpack.c.h.b16 %v239
        %v543 = vunpack.c.l.b16 %v240
        %v544 = vunpack.c.h.b16 %v240
        %v545 = vunpack.c.l.b16 %v241
        %v546 = vunpack.c.h.b16 %v241
        %v547 = vunpack.c.l.b16 %v242
        %v548 = vunpack.c.h.b16 %v242
        %v549 = vpack.c.b16 %v533, %v517
        %v550 = vpack.c.b16 %v534, %v518
        %v551 = vpack.c.b16 %v535, %v519
        %v552 = vpack.c.b16 %v536, %v520
        %v553 = vpack.c.b16 %v537, %v521
        %v554 = vpack.c.b16 %v538, %v522
        %v555 = vpack.c.b16 %v539, %v523
        %v556 = vpack.c.b16 %v540, %v524
        %v557 = vpack.c.b16 %v541, %v525
        %v558 = vpack.c.b16 %v542, %v526
        %v559 = vpack.c.b16 %v543, %v527
        %v560 = vpack.c.b16 %v544, %v528
        %v561 = vpack.c.b16 %v545, %v529
        %v562 = vpack.c.b16 %v546, %v530
        %v563 = vpack.c.b16 %v547, %v531
        %v564 = vpack.c.b16 %v548, %v532
        %v837 = vunpack.c.l.b16 %v243
        %v838 = vunpack.c.l.b16 %v244
        %v839 = vunpack.c.l.b16 %v245
        %v840 = vunpack.c.l.b16 %v246
        %v841 = vunpack.c.l.b16 %v247
        %v842 = vunpack.c.l.b16 %v248
        %v843 = vunpack.c.l.b16 %v249
        %v844 = vunpack.c.l.b16 %v250
        %v845 = vunpack.c.l.b16 %v251
        %v846 = vunpack.c.l.b16 %v252
        %v847 = vunpack.c.l.b16 %v253
        %v848 = vunpack.c.l.b16 %v254
        %v849 = vunpack.c.l.b16 %v255
        %v850 = vunpack.c.l.b16 %v256
        %v851 = vunpack.c.l.b16 %v257
        %v852 = vunpack.c.l.b16 %v258
        %v853 = vunpack.c.l.b16 %v259
        %v854 = vunpack.c.l.b16 %v260
        %v855 = vunpack.c.l.b16 %v261
        %v856 = vunpack.c.l.b16 %v262
        %v857 = vunpack.c.l.b16 %v263
        %v858 = vunpack.c.l.b16 %v264
        %v859 = vunpack.c.l.b16 %v265
        %v860 = vunpack.c.l.b16 %v266
        %v861 = vunpack.c.l.b16 %v267
        %v862 = vunpack.c.l.b16 %v268
        %v863 = vunpack.c.l.b16 %v269
        %v864 = vunpack.c.l.b16 %v270
        %v865 = vunpack.c.l.b16 %v271
        %v866 = vunpack.c.l.b16 %v272
        %v867 = vunpack.c.l.b16 %v273
        %v868 = vunpack.c.l.b16 %v274
        %v869 = vunpack.c.l.b16 %v275
        %v870 = vunpack.c.l.b16 %v276
        %v871 = vunpack.c.l.b16 %v277
        %v872 = vunpack.c.l.b16 %v278
        %v873 = vunpack.c.l.b16 %v279
        %v874 = vunpack.c.l.b16 %v280
        %v875 = vunpack.c.l.b16 %v281
        %v876 = vunpack.c.l.b16 %v282
        %v877 = vunpack.c.l.b16 %v283
        %v878 = vunpack.c.l.b16 %v284
        %v879 = vunpack.c.l.b16 %v285
        %v880 = vunpack.c.l.b16 %v286
        %v881 = vunpack.c.l.b16 %v287
        %v882 = vunpack.c.l.b16 %v288
        %v883 = vunpack.c.l.b16 %v289
        %v884 = vunpack.c.l.b16 %v290
        %v885 = vunpack.c.l.b16 %v291
        %v886 = vunpack.c.l.b16 %v292
        %v887 = vunpack.c.l.b16 %v293
        %v888 = vunpack.c.l.b16 %v294
        %v889 = vunpack.c.l.b16 %v295
        %v890 = vunpack.c.l.b16 %v296
        %v891 = vunpack.c.l.b16 %v297
        %v892 = vunpack.c.l.b16 %v298
        %v893 = vunpack.c.l.b16 %v299
        %v894 = vunpack.c.l.b16 %v300
        %v895 = vunpack.c.l.b16 %v301
        %v896 = vunpack.c.l.b16 %v302
        %v897 = vunpack.c.l.b16 %v303
        %v898 = vunpack.c.l.b16 %v304
        %v899 = vunpack.c.l.b16 %v305
        %v900 = vunpack.c.l.b16 %v306
        %v901 = vunpack.c.l.b16 %v307
        %v902 = vunpack.c.l.b16 %v308
        %v903 = vunpack.c.l.b16 %v309
        %v904 = vunpack.c.l.b16 %v310
        %v905 = vunpack.c.l.b16 %v311
        %v906 = vunpack.c.l.b16 %v312
        %v907 = vunpack.c.l.b16 %v313
        %v908 = vunpack.c.l.b16 %v314
        %v909 = vunpack.c.l.b16 %v315
        %v910 = vunpack.c.l.b16 %v316
        %v911 = vunpack.c.l.b16 %v317
        %v912 = vunpack.c.l.b16 %v318
        %v913 = vunpack.c.l.b16 %v319
        %v914 = vunpack.c.l.b16 %v320
        %v915 = vunpack.c.l.b16 %v321
        %v916 = vunpack.c.l.b16 %v322
        %v917 = vunpack.c.l.b16 %v323
        %v918 = vunpack.c.l.b16 %v324
        %v919 = vunpack.c.l.b16 %v325
        %v920 = vunpack.c.l.b16 %v326
        %v921 = vunpack.c.l.b16 %v327
        %v922 = vunpack.c.l.b16 %v328
        %v923 = vunpack.c.l.b16 %v329
        %v924 = vunpack.c.l.b16 %v330
        %v925 = vunpack.c.l.b16 %v331
        %v926 = vunpack.c.l.b16 %v332
        %v927 = vunpack.c.l.b16 %v333
        %v928 = vunpack.c.l.b16 %v334
        %v929 = vunpack.c.l.b16 %v335
        %v930 = vunpack.c.l.b16 %v336
        %v931 = vunpack.c.l.b16 %v337
        %v932 = vunpack.c.l.b16 %v338
        %v933 = vunpack.c.l.b16 %v339
        %v934 = vunpack.c.l.b16 %v340
        %v935 = vunpack.c.l.b16 %v341
        %v936 = vunpack.c.l.b16 %v342
        %v937 = vunpack.c.l.b16 %v343
        %v938 = vunpack.c.l.b16 %v344
        %v939 = vunpack.c.l.b16 %v345
        %v940 = vunpack.c.l.b16 %v346
        %v941 = vunpack.c.l.b16 %v347
        %v942 = vunpack.c.l.b16 %v348
        %v943 = vunpack.c.l.b16 %v349
        %v944 = vunpack.c.l.b16 %v350
        %v945 = vunpack.c.l.b16 %v351
        %v946 = vunpack.c.l.b16 %v352
        %v947 = vunpack.c.l.b16 %v353
        %v948 = vunpack.c.l.b16 %v354
        %v949 = vunpack.c.l.b16 %v355
        %v950 = vunpack.c.l.b16 %v356
        %v951 = vunpack.c.l.b16 %v357
        %v952 = vunpack.c.l.b16 %v358
        %v953 = vunpack.c.l.b16 %v359
        %v954 = vunpack.c.l.b16 %v360
        %v955 = vunpack.c.l.b16 %v361
        %v956 = vunpack.c.l.b16 %v362
        %v957 = vunpack.c.l.b16 %v363
        %v958 = vunpack.c.l.b16 %v364
        %v959 = vunpack.c.l.b16 %v365
        %v960 = vunpack.c.l.b16 %v366
        %v961 = vunpack.c.l.b16 %v367
        %v962 = vunpack.c.l.b16 %v368
        %v963 = vunpack.c.l.b16 %v369
        %v964 = vunpack.c.l.b16 %v370
        %v965 = vunpack.c.l.b16 %v371
        %v966 = vunpack.c.l.b16 %v372
        %v967 = vunpack.c.l.b16 %v373
        %v968 = vunpack.c.l.b16 %v374
        %v969 = vunpack.c.l.b16 %v375
        %v970 = vunpack.c.l.b16 %v376
        %v971 = vunpack.c.l.b16 %v377
        %v972 = vunpack.c.l.b16 %v378
        %v973 = vunpack.c.l.b16 %v379
        %v974 = vunpack.c.l.b16 %v380
        %v975 = vunpack.c.l.b16 %v381
        %v976 = vunpack.c.l.b16 %v382
        %v977 = vunpack.c.l.b16 %v383
        %v978 = vunpack.c.l.b16 %v384
        %v979 = vunpack.c.l.b16 %v385
        %v980 = vunpack.c.l.b16 %v386
        %v981 = vunpack.c.l.b16 %v387
        %v982 = vunpack.c.l.b16 %v388
        %v983 = vunpack.c.l.b16 %v389
        %v984 = vunpack.c.l.b16 %v390
        %v985 = vunpack.c.l.b16 %v391
        %v986 = vunpack.c.l.b16 %v392
        %v987 = vunpack.c.l.b16 %v393
        %v988 = vunpack.c.l.b16 %v394
        %v989 = vunpack.c.l.b16 %v395
        %v990 = vunpack.c.l.b16 %v396
        %v991 = vunpack.c.l.b16 %v397
        %v992 = vunpack.c.l.b16 %v398
        %v993 = vunpack.c.l.b16 %v399
        %v994 = vunpack.c.l.b16 %v400
        %v995 = vunpack.c.l.b16 %v401
        %v996 = vunpack.c.l.b16 %v402
        %v997 = vunpack.c.l.b16 %v403
        %v998 = vunpack.c.l.b16 %v404
        %v999 = vunpack.c.l.b16 %v405
        %v1000 = vunpack.c.l.b16 %v406
        %v1001 = vunpack.c.l.b16 %v407
        %v1002 = vunpack.c.l.b16 %v408
        %v1003 = vunpack.c.l.b16 %v409
        %v1004 = vunpack.c.l.b16 %v410
        %v1005 = vunpack.c.l.b16 %v411
        %v1006 = vunpack.c.l.b16 %v412
        %v1007 = vunpack.c.l.b16 %v413
        %v1008 = vunpack.c.l.b16 %v414
        %v1009 = vunpack.c.l.b16 %v415
        %v1010 = vunpack.c.l.b16 %v416
        %v1011 = vunpack.c.l.b16 %v417
        %v1012 = vunpack.c.l.b16 %v418
        %v1013 = vunpack.c.l.b16 %v419
        %v1014 = vunpack.c.l.b16 %v420
        %v1015 = vunpack.c.l.b16 %v421
        %v1016 = vunpack.c.l.b16 %v422
        %v1017 = vunpack.c.l.b16 %v423
        %v1018 = vunpack.c.l.b16 %v424
        %v1019 = vunpack.c.l.b16 %v425
        %v1020 = vunpack.c.l.b16 %v426
        %v1021 = vunpack.c.l.b16 %v427
        %v1022 = vunpack.c.l.b16 %v428
        %v1023 = vunpack.c.l.b16 %v429
        %v1024 = vunpack.c.l.b16 %v430
        %v1025 = vunpack.c.l.b16 %v431
        %v1026 = vunpack.c.l.b16 %v432
        %v1027 = vunpack.c.l.b16 %v433
        %v1028 = vunpack.c.l.b16 %v434
        %v1029 = vunpack.c.l.b16 %v435
        %v1030 = vunpack.c.l.b16 %v436
        %v1031 = vunpack.c.l.b16 %v437
        %v1032 = vunpack.c.l.b16 %v438
        %v1033 = vunpack.c.l.b16 %v439
        %v1034 = vunpack.c.l.b16 %v440
        %v1035 = vunpack.c.l.b16 %v441
        %v1036 = vunpack.c.l.b16 %v442
        %v1037 = vunpack.c.l.b16 %v443
        %v1038 = vunpack.c.l.b16 %v444
        %v1039 = vunpack.c.l.b16 %v445
        %v1040 = vunpack.c.l.b16 %v446
        %v1041 = vunpack.c.l.b16 %v447
        %v1042 = vunpack.c.l.b16 %v448
        %v1043 = vunpack.c.l.b16 %v449
        %v1044 = vunpack.c.l.b16 %v450
        %v1045 = vunpack.c.l.b16 %v451
        %v1046 = vunpack.c.l.b16 %v452
        %v1047 = vunpack.c.l.b16 %v453
        %v1048 = vunpack.c.l.b16 %v454
        %v1049 = vunpack.c.l.b16 %v455
        %v1050 = vunpack.c.l.b16 %v456
        %v1051 = vunpack.c.l.b16 %v457
        %v1052 = vunpack.c.l.b16 %v458
        %v1053 = vunpack.c.l.b16 %v459
        %v1054 = vunpack.c.l.b16 %v460
        %v1055 = vunpack.c.l.b16 %v461
        %v1056 = vunpack.c.l.b16 %v462
        %v1057 = vunpack.c.l.b16 %v463
        %v1058 = vunpack.c.l.b16 %v464
        %v1059 = vunpack.c.l.b16 %v465
        %v1060 = vunpack.c.l.b16 %v466
        %v1061 = vunpack.c.l.b16 %v467
        %v1062 = vunpack.c.l.b16 %v468
        %v1063 = vunpack.c.l.b16 %v469
        %v1064 = vunpack.c.l.b16 %v470
        %v1065 = vunpack.c.l.b16 %v471
        %v1066 = vunpack.c.l.b16 %v472
        %v1067 = vunpack.c.l.b16 %v473
        %v1068 = vunpack.c.l.b16 %v474
        %v1069 = vunpack.c.l.b16 %v475
        %v1070 = vunpack.c.l.b16 %v476
        %v1071 = vunpack.c.l.b16 %v477
        %v1072 = vunpack.c.l.b16 %v478
        %v1073 = vunpack.c.l.b16 %v479
        %v1074 = vunpack.c.l.b16 %v480
        %v1075 = vunpack.c.l.b16 %v481
        %v1076 = vunpack.c.l.b16 %v482
        %v1077 = vunpack.c.l.b16 %v483
        %v1078 = vunpack.c.l.b16 %v484
        %v1079 = vunpack.c.l.b16 %v485
        %v1080 = vunpack.c.l.b16 %v486
        %v1081 = vunpack.c.l.b16 %v487
        %v1082 = vunpack.c.l.b16 %v488
        %v1083 = vunpack.c.l.b16 %v489
        %v1084 = vunpack.c.l.b16 %v490
        %v1085 = vunpack.c.l.b16 %v491
        %v1086 = vunpack.c.l.b16 %v492
        %v1087 = vunpack.c.l.b16 %v493
        %v1088 = vunpack.c.l.b16 %v494
        %v1089 = vunpack.c.l.b16 %v495
        %v1090 = vunpack.c.l.b16 %v496
        %v1091 = vunpack.c.l.b16 %v497
        %v1092 = vunpack.c.l.b16 %v498
        %v1093 = vpack.c.b16 %v838, %v837
        %v1094 = vpack.c.b16 %v840, %v839
        %v1095 = vpack.c.b16 %v842, %v841
        %v1096 = vpack.c.b16 %v844, %v843
        %v1097 = vpack.c.b16 %v846, %v845
        %v1098 = vpack.c.b16 %v848, %v847
        %v1099 = vpack.c.b16 %v850, %v849
        %v1100 = vpack.c.b16 %v852, %v851
        %v1101 = vpack.c.b16 %v854, %v853
        %v1102 = vpack.c.b16 %v856, %v855
        %v1103 = vpack.c.b16 %v858, %v857
        %v1104 = vpack.c.b16 %v860, %v859
        %v1105 = vpack.c.b16 %v862, %v861
        %v1106 = vpack.c.b16 %v864, %v863
        %v1107 = vpack.c.b16 %v866, %v865
        %v1108 = vpack.c.b16 %v868, %v867
        %v1109 = vpack.c.b16 %v870, %v869
        %v1110 = vpack.c.b16 %v872, %v871
        %v1111 = vpack.c.b16 %v874, %v873
        %v1112 = vpack.c.b16 %v876, %v875
        %v1113 = vpack.c.b16 %v878, %v877
        %v1114 = vpack.c.b16 %v880, %v879
        %v1115 = vpack.c.b16 %v882, %v881
        %v1116 = vpack.c.b16 %v884, %v883
        %v1117 = vpack.c.b16 %v886, %v885
        %v1118 = vpack.c.b16 %v888, %v887
        %v1119 = vpack.c.b16 %v890, %v889
        %v1120 = vpack.c.b16 %v892, %v891
        %v1121 = vpack.c.b16 %v894, %v893
        %v1122 = vpack.c.b16 %v896, %v895
        %v1123 = vpack.c.b16 %v898, %v897
        %v1124 = vpack.c.b16 %v900, %v899
        %v1125 = vpack.c.b16 %v902, %v901
        %v1126 = vpack.c.b16 %v904, %v903
        %v1127 = vpack.c.b16 %v906, %v905
        %v1128 = vpack.c.b16 %v908, %v907
        %v1129 = vpack.c.b16 %v910, %v909
        %v1130 = vpack.c.b16 %v912, %v911
        %v1131 = vpack.c.b16 %v914, %v913
        %v1132 = vpack.c.b16 %v916, %v915
        %v1133 = vpack.c.b16 %v918, %v917
        %v1134 = vpack.c.b16 %v920, %v919
        %v1135 = vpack.c.b16 %v922, %v921
        %v1136 = vpack.c.b16 %v924, %v923
        %v1137 = vpack.c.b16 %v926, %v925
        %v1138 = vpack.c.b16 %v928, %v927
        %v1139 = vpack.c.b16 %v930, %v929
        %v1140 = vpack.c.b16 %v932, %v931
        %v1141 = vpack.c.b16 %v934, %v933
        %v1142 = vpack.c.b16 %v936, %v935
        %v1143 = vpack.c.b16 %v938, %v937
        %v1144 = vpack.c.b16 %v940, %v939
        %v1145 = vpack.c.b16 %v942, %v941
        %v1146 = vpack.c.b16 %v944, %v943
        %v1147 = vpack.c.b16 %v946, %v945
        %v1148 = vpack.c.b16 %v948, %v947
        %v1149 = vpack.c.b16 %v950, %v949
        %v1150 = vpack.c.b16 %v952, %v951
        %v1151 = vpack.c.b16 %v954, %v953
        %v1152 = vpack.c.b16 %v956, %v955
        %v1153 = vpack.c.b16 %v958, %v957
        %v1154 = vpack.c.b16 %v960, %v959
        %v1155 = vpack.c.b16 %v962, %v961
        %v1156 = vpack.c.b16 %v964, %v963
        %v1157 = vpack.c.b16 %v966, %v965
        %v1158 = vpack.c.b16 %v968, %v967
        %v1159 = vpack.c.b16 %v970, %v969
        %v1160 = vpack.c.b16 %v972, %v971
        %v1161 = vpack.c.b16 %v974, %v973
        %v1162 = vpack.c.b16 %v976, %v975
        %v1163 = vpack.c.b16 %v978, %v977
        %v1164 = vpack.c.b16 %v980, %v979
        %v1165 = vpack.c.b16 %v982, %v981
        %v1166 = vpack.c.b16 %v984, %v983
        %v1167 = vpack.c.b16 %v986, %v985
        %v1168 = vpack.c.b16 %v988, %v987
        %v1169 = vpack.c.b16 %v990, %v989
        %v1170 = vpack.c.b16 %v992, %v991
        %v1171 = vpack.c.b16 %v994, %v993
        %v1172 = vpack.c.b16 %v996, %v995
        %v1173 = vpack.c.b16 %v998, %v997
        %v1174 = vpack.c.b16 %v1000, %v999
        %v1175 = vpack.c.b16 %v1002, %v1001
        %v1176 = vpack.c.b16 %v1004, %v1003
        %v1177 = vpack.c.b16 %v1006, %v1005
        %v1178 = vpack.c.b16 %v1008, %v1007
        %v1179 = vpack.c.b16 %v1010, %v1009
        %v1180 = vpack.c.b16 %v1012, %v1011
        %v1181 = vpack.c.b16 %v1014, %v1013
        %v1182 = vpack.c.b16 %v1016, %v1015
        %v1183 = vpack.c.b16 %v1018, %v1017
        %v1184 = vpack.c.b16 %v1020, %v1019
        %v1185 = vpack.c.b16 %v1022, %v1021
        %v1186 = vpack.c.b16 %v1024, %v1023
        %v1187 = vpack.c.b16 %v1026, %v1025
        %v1188 = vpack.c.b16 %v1028, %v1027
        %v1189 = vpack.c.b16 %v1030, %v1029
        %v1190 = vpack.c.b16 %v1032, %v1031
        %v1191 = vpack.c.b16 %v1034, %v1033
        %v1192 = vpack.c.b16 %v1036, %v1035
        %v1193 = vpack.c.b16 %v1038, %v1037
        %v1194 = vpack.c.b16 %v1040, %v1039
        %v1195 = vpack.c.b16 %v1042, %v1041
        %v1196 = vpack.c.b16 %v1044, %v1043
        %v1197 = vpack.c.b16 %v1046, %v1045
        %v1198 = vpack.c.b16 %v1048, %v1047
        %v1199 = vpack.c.b16 %v1050, %v1049
        %v1200 = vpack.c.b16 %v1052, %v1051
        %v1201 = vpack.c.b16 %v1054, %v1053
        %v1202 = vpack.c.b16 %v1056, %v1055
        %v1203 = vpack.c.b16 %v1058, %v1057
        %v1204 = vpack.c.b16 %v1060, %v1059
        %v1205 = vpack.c.b16 %v1062, %v1061
        %v1206 = vpack.c.b16 %v1064, %v1063
        %v1207 = vpack.c.b16 %v1066, %v1065
        %v1208 = vpack.c.b16 %v1068, %v1067
        %v1209 = vpack.c.b16 %v1070, %v1069
        %v1210 = vpack.c.b16 %v1072, %v1071
        %v1211 = vpack.c.b16 %v1074, %v1073
        %v1212 = vpack.c.b16 %v1076, %v1075
        %v1213 = vpack.c.b16 %v1078, %v1077
        %v1214 = vpack.c.b16 %v1080, %v1079
        %v1215 = vpack.c.b16 %v1082, %v1081
        %v1216 = vpack.c.b16 %v1084, %v1083
        %v1217 = vpack.c.b16 %v1086, %v1085
        %v1218 = vpack.c.b16 %v1088, %v1087
        %v1219 = vpack.c.b16 %v1090, %v1089
        %v1220 = vpack.c.b16 %v1092, %v1091
        %1349 = vmatpush.bf16.msra.mxu0 %v1100
        %1350 = vmatpush.bf16.msra.mxu0 %v1099
        %1351 = vmatpush.bf16.msra.mxu0 %v1098
        %1352 = vmatpush.bf16.msra.mxu0 %v1097
        %1353 = vmatpush.bf16.msra.mxu0 %v1096
        %1354 = vmatpush.bf16.msra.mxu0 %v1095
        %1355 = vmatpush.bf16.msra.mxu0 %v1094
        %1356 = vmatpush.bf16.msra.mxu0 %v1093
        %1357 = vmatmul.bf16.gmra.mxu0 %v549
        %v1358 = vpop.f32.mrf.mxu0
        %v1359 = vadd.f32 %v499, %v1358
        %v1360 = vpop.f32.mrf.mxu0
        %v1361 = vadd.f32 %v500, %v1360
        %1362 = vdwg.mxu0
        %1363 = vmatpush.bf16.msra.mxu0 %v1108
        %1364 = vmatpush.bf16.msra.mxu0 %v1107
        %1365 = vmatpush.bf16.msra.mxu0 %v1106
        %1366 = vmatpush.bf16.msra.mxu0 %v1105
        %1367 = vmatpush.bf16.msra.mxu0 %v1104
        %1368 = vmatpush.bf16.msra.mxu0 %v1103
        %1369 = vmatpush.bf16.msra.mxu0 %v1102
        %1370 = vmatpush.bf16.msra.mxu0 %v1101
        %1371 = vmatmul.bf16.gmra.mxu0 %v550
        %v1372 = vpop.f32.mrf.mxu0
        %v1373 = vadd.f32 %v1359, %v1372
        %v1374 = vpop.f32.mrf.mxu0
        %v1375 = vadd.f32 %v1361, %v1374
        %1376 = vdwg.mxu0
        %1377 = vmatpush.bf16.msra.mxu0 %v1116
        %1378 = vmatpush.bf16.msra.mxu0 %v1115
        %1379 = vmatpush.bf16.msra.mxu0 %v1114
        %1380 = vmatpush.bf16.msra.mxu0 %v1113
        %1381 = vmatpush.bf16.msra.mxu0 %v1112
        %1382 = vmatpush.bf16.msra.mxu0 %v1111
        %1383 = vmatpush.bf16.msra.mxu0 %v1110
        %1384 = vmatpush.bf16.msra.mxu0 %v1109
        %1385 = vmatmul.bf16.gmra.mxu0 %v551
        %v1386 = vpop.f32.mrf.mxu0
        %v1387 = vadd.f32 %v1373, %v1386
        %v1388 = vpop.f32.mrf.mxu0
        %v1389 = vadd.f32 %v1375, %v1388
        %1390 = vdwg.mxu0
        %1391 = vmatpush.bf16.msra.mxu0 %v1124
        %1392 = vmatpush.bf16.msra.mxu0 %v1123
        %1393 = vmatpush.bf16.msra.mxu0 %v1122
        %1394 = vmatpush.bf16.msra.mxu0 %v1121
        %1395 = vmatpush.bf16.msra.mxu0 %v1120
        %1396 = vmatpush.bf16.msra.mxu0 %v1119
        %1397 = vmatpush.bf16.msra.mxu0 %v1118
        %1398 = vmatpush.bf16.msra.mxu0 %v1117
        %1399 = vmatmul.bf16.gmra.mxu0 %v552
        %v1400 = vpop.f32.mrf.mxu0
        %v1401 = vadd.f32 %v1387, %v1400
        %v1402 = vpop.f32.mrf.mxu0
        %v1403 = vadd.f32 %v1389, %v1402
        %1404 = vdwg.mxu0
        %1405 = vmatpush.bf16.msra.mxu0 %v1132
        %1406 = vmatpush.bf16.msra.mxu0 %v1131
        %1407 = vmatpush.bf16.msra.mxu0 %v1130
        %1408 = vmatpush.bf16.msra.mxu0 %v1129
        %1409 = vmatpush.bf16.msra.mxu0 %v1128
        %1410 = vmatpush.bf16.msra.mxu0 %v1127
        %1411 = vmatpush.bf16.msra.mxu0 %v1126
        %1412 = vmatpush.bf16.msra.mxu0 %v1125
        %1413 = vmatmul.bf16.gmra.mxu0 %v553
        %v1414 = vpop.f32.mrf.mxu0
        %v1415 = vadd.f32 %v1401, %v1414
        %v1416 = vpop.f32.mrf.mxu0
        %v1417 = vadd.f32 %v1403, %v1416
        %1418 = vdwg.mxu0
        %1419 = vmatpush.bf16.msra.mxu0 %v1140
        %1420 = vmatpush.bf16.msra.mxu0 %v1139
        %1421 = vmatpush.bf16.msra.mxu0 %v1138
        %1422 = vmatpush.bf16.msra.mxu0 %v1137
        %1423 = vmatpush.bf16.msra.mxu0 %v1136
        %1424 = vmatpush.bf16.msra.mxu0 %v1135
        %1425 = vmatpush.bf16.msra.mxu0 %v1134
        %1426 = vmatpush.bf16.msra.mxu0 %v1133
        %1427 = vmatmul.bf16.gmra.mxu0 %v554
        %v1428 = vpop.f32.mrf.mxu0
        %v1429 = vadd.f32 %v1415, %v1428
        %v1430 = vpop.f32.mrf.mxu0
        %v1431 = vadd.f32 %v1417, %v1430
        %1432 = vdwg.mxu0
        %1433 = vmatpush.bf16.msra.mxu0 %v1148
        %1434 = vmatpush.bf16.msra.mxu0 %v1147
        %1435 = vmatpush.bf16.msra.mxu0 %v1146
        %1436 = vmatpush.bf16.msra.mxu0 %v1145
        %1437 = vmatpush.bf16.msra.mxu0 %v1144
        %1438 = vmatpush.bf16.msra.mxu0 %v1143
        %1439 = vmatpush.bf16.msra.mxu0 %v1142
        %1440 = vmatpush.bf16.msra.mxu0 %v1141
        %1441 = vmatmul.bf16.gmra.mxu0 %v555
        %v1442 = vpop.f32.mrf.mxu0
        %v1443 = vadd.f32 %v1429, %v1442
        %v1444 = vpop.f32.mrf.mxu0
        %v1445 = vadd.f32 %v1431, %v1444
        %1446 = vdwg.mxu0
        %1447 = vmatpush.bf16.msra.mxu0 %v1156
        %1448 = vmatpush.bf16.msra.mxu0 %v1155
        %1449 = vmatpush.bf16.msra.mxu0 %v1154
        %1450 = vmatpush.bf16.msra.mxu0 %v1153
        %1451 = vmatpush.bf16.msra.mxu0 %v1152
        %1452 = vmatpush.bf16.msra.mxu0 %v1151
        %1453 = vmatpush.bf16.msra.mxu0 %v1150
        %1454 = vmatpush.bf16.msra.mxu0 %v1149
        %1455 = vmatmul.bf16.gmra.mxu0 %v556
        %v1456 = vpop.f32.mrf.mxu0
        %v1457 = vadd.f32 %v1443, %v1456
        %v1458 = vpop.f32.mrf.mxu0
        %v1459 = vadd.f32 %v1445, %v1458
        %1460 = vdwg.mxu0
        %1461 = vmatpush.bf16.msra.mxu0 %v1164
        %1462 = vmatpush.bf16.msra.mxu0 %v1163
        %1463 = vmatpush.bf16.msra.mxu0 %v1162
        %1464 = vmatpush.bf16.msra.mxu0 %v1161
        %1465 = vmatpush.bf16.msra.mxu0 %v1160
        %1466 = vmatpush.bf16.msra.mxu0 %v1159
        %1467 = vmatpush.bf16.msra.mxu0 %v1158
        %1468 = vmatpush.bf16.msra.mxu0 %v1157
        %1469 = vmatmul.bf16.gmra.mxu0 %v557
        %v1470 = vpop.f32.mrf.mxu0
        %v1471 = vadd.f32 %v1457, %v1470
        %v1472 = vpop.f32.mrf.mxu0
        %v1473 = vadd.f32 %v1459, %v1472
        %1474 = vdwg.mxu0
        %1475 = vmatpush.bf16.msra.mxu0 %v1172
        %1476 = vmatpush.bf16.msra.mxu0 %v1171
        %1477 = vmatpush.bf16.msra.mxu0 %v1170
        %1478 = vmatpush.bf16.msra.mxu0 %v1169
        %1479 = vmatpush.bf16.msra.mxu0 %v1168
        %1480 = vmatpush.bf16.msra.mxu0 %v1167
        %1481 = vmatpush.bf16.msra.mxu0 %v1166
        %1482 = vmatpush.bf16.msra.mxu0 %v1165
        %1483 = vmatmul.bf16.gmra.mxu0 %v558
        %v1484 = vpop.f32.mrf.mxu0
        %v1485 = vadd.f32 %v1471, %v1484
        %v1486 = vpop.f32.mrf.mxu0
        %v1487 = vadd.f32 %v1473, %v1486
        %1488 = vdwg.mxu0
        %1489 = vmatpush.bf16.msra.mxu0 %v1180
        %1490 = vmatpush.bf16.msra.mxu0 %v1179
        %1491 = vmatpush.bf16.msra.mxu0 %v1178
        %1492 = vmatpush.bf16.msra.mxu0 %v1177
        %1493 = vmatpush.bf16.msra.mxu0 %v1176
        %1494 = vmatpush.bf16.msra.mxu0 %v1175
        %1495 = vmatpush.bf16.msra.mxu0 %v1174
        %1496 = vmatpush.bf16.msra.mxu0 %v1173
        %1497 = vmatmul.bf16.gmra.mxu0 %v559
        %v1498 = vpop.f32.mrf.mxu0
        %v1499 = vadd.f32 %v1485, %v1498
        %v1500 = vpop.f32.mrf.mxu0
        %v1501 = vadd.f32 %v1487, %v1500
        %1502 = vdwg.mxu0
        %1503 = vmatpush.bf16.msra.mxu0 %v1188
        %1504 = vmatpush.bf16.msra.mxu0 %v1187
        %1505 = vmatpush.bf16.msra.mxu0 %v1186
        %1506 = vmatpush.bf16.msra.mxu0 %v1185
        %1507 = vmatpush.bf16.msra.mxu0 %v1184
        %1508 = vmatpush.bf16.msra.mxu0 %v1183
        %1509 = vmatpush.bf16.msra.mxu0 %v1182
        %1510 = vmatpush.bf16.msra.mxu0 %v1181
        %1511 = vmatmul.bf16.gmra.mxu0 %v560
        %v1512 = vpop.f32.mrf.mxu0
        %v1513 = vadd.f32 %v1499, %v1512
        %v1514 = vpop.f32.mrf.mxu0
        %v1515 = vadd.f32 %v1501, %v1514
        %1516 = vdwg.mxu0
        %1517 = vmatpush.bf16.msra.mxu0 %v1196
        %1518 = vmatpush.bf16.msra.mxu0 %v1195
        %1519 = vmatpush.bf16.msra.mxu0 %v1194
        %1520 = vmatpush.bf16.msra.mxu0 %v1193
        %1521 = vmatpush.bf16.msra.mxu0 %v1192
        %1522 = vmatpush.bf16.msra.mxu0 %v1191
        %1523 = vmatpush.bf16.msra.mxu0 %v1190
        %1524 = vmatpush.bf16.msra.mxu0 %v1189
        %1525 = vmatmul.bf16.gmra.mxu0 %v561
        %v1526 = vpop.f32.mrf.mxu0
        %v1527 = vadd.f32 %v1513, %v1526
        %v1528 = vpop.f32.mrf.mxu0
        %v1529 = vadd.f32 %v1515, %v1528
        %1530 = vdwg.mxu0
        %1531 = vmatpush.bf16.msra.mxu0 %v1204
        %1532 = vmatpush.bf16.msra.mxu0 %v1203
        %1533 = vmatpush.bf16.msra.mxu0 %v1202
        %1534 = vmatpush.bf16.msra.mxu0 %v1201
        %1535 = vmatpush.bf16.msra.mxu0 %v1200
        %1536 = vmatpush.bf16.msra.mxu0 %v1199
        %1537 = vmatpush.bf16.msra.mxu0 %v1198
        %1538 = vmatpush.bf16.msra.mxu0 %v1197
        %1539 = vmatmul.bf16.gmra.mxu0 %v562
        %v1540 = vpop.f32.mrf.mxu0
        %v1541 = vadd.f32 %v1527, %v1540
        %v1542 = vpop.f32.mrf.mxu0
        %v1543 = vadd.f32 %v1529, %v1542
        %1544 = vdwg.mxu0
        %1545 = vmatpush.bf16.msra.mxu0 %v1212
        %1546 = vmatpush.bf16.msra.mxu0 %v1211
        %1547 = vmatpush.bf16.msra.mxu0 %v1210
        %1548 = vmatpush.bf16.msra.mxu0 %v1209
        %1549 = vmatpush.bf16.msra.mxu0 %v1208
        %1550 = vmatpush.bf16.msra.mxu0 %v1207
        %1551 = vmatpush.bf16.msra.mxu0 %v1206
        %1552 = vmatpush.bf16.msra.mxu0 %v1205
        %1553 = vmatmul.bf16.gmra.mxu0 %v563
        %v1554 = vpop.f32.mrf.mxu0
        %v1555 = vadd.f32 %v1541, %v1554
        %v1556 = vpop.f32.mrf.mxu0
        %v1557 = vadd.f32 %v1543, %v1556
        %1558 = vdwg.mxu0
        %1559 = vmatpush.bf16.msra.mxu0 %v1220
        %1560 = vmatpush.bf16.msra.mxu0 %v1219
        %1561 = vmatpush.bf16.msra.mxu0 %v1218
        %1562 = vmatpush.bf16.msra.mxu0 %v1217
        %1563 = vmatpush.bf16.msra.mxu0 %v1216
        %1564 = vmatpush.bf16.msra.mxu0 %v1215
        %1565 = vmatpush.bf16.msra.mxu0 %v1214
        %1566 = vmatpush.bf16.msra.mxu0 %v1213
        %1567 = vmatmul.bf16.gmra.mxu0 %v564
        %v1568 = vpop.f32.mrf.mxu0
        %v1569 = vadd.f32 %v1555, %v1568
        %v1570 = vpop.f32.mrf.mxu0
        %v1571 = vadd.f32 %v1557, %v1570
        %1572 = vdwg.mxu0
        %1573 = vst [vmem:[%s224] sm:$0xff] %v1569
        %1574 = vst [vmem:[%s224 + $0x8] sm:$0xff] %v1571
        %s1575 = sand.u32 %s97, 1
        %s1576 = scalar_lea.sflag [#allocation4], %s1575
        %s1577 = sand.u32 %s97, 1
        %s1578 = smul.addr %s1577, 16
        %s1579 = scalar_lea.vmem [#allocation8], %s1578
        // Predicated region
        $region45: #{tpu_custom_call.1} parent=31 // pred_check
          %p1580 = pneg %p107
        $region46: #{tpu_custom_call.1} parent=31 // pred_check_branch
          %1582 = sbr.rel (%p1580) target = $region48
        $region47: #{tpu_custom_call.1} parent=31 // pred_region
          %s1583 = smul.u32 2, %s21
          %1585 = vsyncadd %s1576, 0
          %s1586 = smul.addr %s1583, 8
          %s1587 = scalar_lea.hbm %s3, %s1586
          %s1588 = sshll.u32 %s1579, 4
          %s1589 = int_to_ptr.vmem [resolvable:$true] %s1588
          %s1590 = sshll.u32 %s1587, 4
          %s1591 = int_to_ptr.hbm [resolvable:$true] %s1590
          %1596 = dma.vmem_to_hbm [thread:$0]  %s1589, 256, %s1591, %s1576, 128, 128, 8
        $region48: #{tpu_custom_call.1} parent=31 // pred_fallthru
          _
      $region32: #{tpu_custom_call.1} parent=5 // pred_fallthru
        _
      %p1597 = scmp.le.s32.totalorder 2, %s16
      // Predicated region
      $region49: #{tpu_custom_call.1} parent=5 // pred_check
        %p1598 = pneg %p1597
      $region50: #{tpu_custom_call.1} parent=5 // pred_check_branch
        %1600 = sbr.rel (%p1598) target = $region52
      $region51: #{tpu_custom_call.1} parent=5 // pred_region
        %s1601 = ssub.s32 %s16, 2
        // Predicated region
        $region53: #{tpu_custom_call.1} parent=51 // pred_check
          %p1602 = pneg %p113
        $region54: #{tpu_custom_call.1} parent=51 // pred_check_branch
          %1604 = sbr.rel (%p1602) target = $region56
        $region55: #{tpu_custom_call.1} parent=51 // pred_region
          %s1605 = sand.u32 %s98, 1
          %s1606 = scalar_lea.sflag [#allocation4], %s1605
          %s1607 = sand.u32 %s98, 1
          %s1608 = smul.addr %s1607, 16
          %s1609 = scalar_lea.vmem [#allocation8], %s1608
          %1611 = dma.done %s1606, 256
        $region56: #{tpu_custom_call.1} parent=51 // pred_fallthru
          _
      $region52: #{tpu_custom_call.1} parent=5 // pred_fallthru
        _
    $region6: #{tpu_custom_call.1} parent=1 // loop_footer
      %s20 = sadd.s32 1, %s16
    $region7: #{tpu_custom_call.1} parent=1 // loop_footer_branch
      %15 = sbr.rel target = $region3
    $region8: #{tpu_custom_call.1} parent=1 // loop_exit
      _
    %1612 = vsyncpa [#allocation3], 1
    %s1613 = scalar_lea.sflag [#allocation3], 1
    %1614 = vsyncpa %s1613, 1
    %1615 = vsyncpa [#allocation6], 1
    %1616 = vsyncpa [#allocation4], 1
    %s1617 = scalar_lea.sflag [#allocation4], 1
    %1618 = vsyncpa %s1617, 1

</llo_original>
